<compile_context>
chip_gen: v5e
topology: v5e:2x2
jax: 0.10.0
libtpu: 0.0.40
codegen_flags: <defaults>
</compile_context>

<pallas_src>
import functools

import jax
import jax.numpy as jnp
import numpy as np
from jax.experimental import pallas as pl
from jax.experimental.pallas import tpu as pltpu

EPS = 1e-5  # RevIN eps


# --------------------------------------------------------------------------------------
# Kernel
# --------------------------------------------------------------------------------------
def _dlinear_kernel(x_ref, rin_ref, w_ref, b_ref, o_ref):
    x = x_ref[...]                 # [TR, T] f32 row tile (rows = flattened (batch, channel))
    aw = rin_ref[:, 0:1]           # [TR, 1] RevIN affine weight (per row)
    ab = rin_ref[:, 1:2]           # [TR, 1] RevIN affine bias
    inv_aw = rin_ref[:, 2:3]       # [TR, 1] precomputed 1 / (weight + eps^2)

    # --- RevIN 'norm': per-row stats over time (unbiased=False variance) ---
    inv_t = 1.0 / float(x.shape[1])
    mean = jnp.sum(x, axis=1, keepdims=True) * inv_t                # [TR, 1]
    xc = x - mean                                                   # reused for var AND xn
    var = jnp.sum(xc * xc, axis=1, keepdims=True) * inv_t           # [TR, 1]
    rstd = jax.lax.rsqrt(var + EPS)                                 # EUP, no divide
    stdev = (var + EPS) * rstd                                      # == sqrt(var + EPS)
    xn = xc * (rstd * aw) + ab                                      # [TR, T]

    # --- fused decomposition + dual heads: single [TR,T] @ [T,Dp] matmul ---
    y = jnp.dot(xn, w_ref[...], preferred_element_type=jnp.float32) + b_ref[...]   # [TR, Dp]

    # --- RevIN 'denorm' (reciprocal hoisted to the wrapper) ---
    o_ref[...] = ((y - ab) * (inv_aw * stdev) + mean).astype(o_ref.dtype)


# --------------------------------------------------------------------------------------
# Parameter preparation (run ONCE per parameter set, outside the per-call hot path)
# --------------------------------------------------------------------------------------
def _build_avg_matrix(seq_len, kernel_size):
    """A [T, T] matrix s.t. x @ A == moving_average(x) with replicate padding (stride 1)."""
    assert kernel_size % 2 == 1, "kernel_size must be odd (default 25)"
    pad = (kernel_size - 1) // 2
    p = jnp.arange(seq_len + 2 * pad)
    src = jnp.clip(p - pad, 0, seq_len - 1)                              # padded pos -> source idx
    onehot = jax.nn.one_hot(src, seq_len, dtype=jnp.float32)             # [P, T]
    j = jnp.arange(seq_len)
    win = ((p[:, None] >= j[None, :]) &
           (p[:, None] <= j[None, :] + kernel_size - 1)).astype(jnp.float32)  # [P, T]
    return (onehot.T @ win) / float(kernel_size)                         # [T, T]


def _lane_pad_cols(d):
    """Pad output columns to a multiple of 128 only when it pays (D >= 64, not already dense)."""
    if d >= 64 and d % 128 != 0:
        return ((d + 127) // 128) * 128
    return d


def prepare_dlinear(params, kernel_size=25):
    """Fold STL + both heads into one effective weight and pack per-channel RevIN params.

    Returns (prepared_dict, d_output).  Call once when parameters change; the result is
    reused by every dlinear_forward call (keeps the [T,T] build and [T,T]@[T,D] matmul,
    plus the RevIN reciprocal, out of the per-call path).
    """
    w_s = params["w_season"].astype(jnp.float32)      # [T, D]
    w_t = params["w_trend"].astype(jnp.float32)       # [T, D]
    T, D = w_s.shape

    #   y = season@Ws + trend@Wt + b = xn@Ws + (xn@A)@(Wt - Ws) + b = xn@(Ws + A@(Wt-Ws)) + b
    A = _build_avg_matrix(T, kernel_size)                              # [T, T]
    w_eff = w_s + A @ (w_t - w_s)                                      # [T, D]
    b_eff = (params["b_season"] + params["b_trend"]).astype(jnp.float32).reshape(1, D)

    d_pad = _lane_pad_cols(D)
    if d_pad != D:                                                     # lane-dense output path
        w_eff = jnp.pad(w_eff, ((0, 0), (0, d_pad - D)))
        b_eff = jnp.pad(b_eff, ((0, 0), (0, d_pad - D)))

    aw = params["rin_weight"].astype(jnp.float32)
    ab = params["rin_bias"].astype(jnp.float32)
    inv_aw = 1.0 / (aw + EPS * EPS)                                    # hoisted reciprocal
    rin = jnp.stack([aw, ab, inv_aw], axis=-1)                         # [C, 3]

    return {"w_eff": w_eff, "b_eff": b_eff, "rin": rin}, int(D)


# --------------------------------------------------------------------------------------
# Tiling heuristics
# --------------------------------------------------------------------------------------
def _round_up(v, m):
    return ((v + m - 1) // m) * m


def _pick_tile_rows(n_rows, seq_len, d_pad):
    """Row tile: multiple of 8, sized by VMEM bytes, with >=2 grid steps when rows allow."""
    if n_rows <= 8:
        return n_rows                                   # single full-array tile
    # Per-row bytes of the double-buffered streams: x[T] + out[Dp] + lane-padded rin (128).
    bytes_per_row = 4 * (seq_len + d_pad + 128)
    by_bytes = max(8, ((20 * 1024 * 1024) // (2 * bytes_per_row)) // 8 * 8)
    # >= 2 grid steps so v7x's two TensorCores both get work (no-op on v5e/v6e) ...
    by_half = _round_up(pl.cdiv(n_rows, 2), 8)
    # ... and aim for ~8 steps on large inputs while keeping tiles big enough to amortize
    # the ~0.35 us per-grid-step overhead.
    by_eighth = max(512, _round_up(pl.cdiv(n_rows, 8), 8))
    return max(8, min(by_bytes, by_half, by_eighth))


# --------------------------------------------------------------------------------------
# Forward
# --------------------------------------------------------------------------------------
@functools.partial(jax.jit, static_argnames=("d_output",))
def dlinear_forward(x, w_eff, b_eff, rin, *, d_output):
    """x: [B, C, T] float32; prepared params from prepare_dlinear.  Returns [B, C, D]."""
    B, C, T = x.shape
    d_pad = w_eff.shape[1]
    R = B * C

    xr = x.reshape(R, T)
    rin_rows = jnp.broadcast_to(rin[None], (B, C, 3)).reshape(R, 3)    # tiny [R, 3]

    tile_r = _pick_tile_rows(R, T, d_pad)
    grid = (pl.cdiv(R, tile_r),)   # ragged last tile: OOB reads are per-row-only garbage,
                                   # OOB output writes are masked by Pallas -> no padded copy.

    cost = pl.CostEstimate(
        flops=2 * R * T * d_pad + 8 * R * T,
        transcendentals=R,
        bytes_accessed=4 * (R * T + R * d_pad + R * 3 + T * d_pad + d_pad),
    )

    out = pl.pallas_call(
        _dlinear_kernel,
        out_shape=jax.ShapeDtypeStruct((R, d_pad), jnp.float32),
        grid_spec=pltpu.PrefetchScalarGridSpec(
            num_scalar_prefetch=0,
            grid=grid,
            in_specs=[
                pl.BlockSpec((tile_r, T), lambda i: (i, 0)),           # x row tile (dominant)
                pl.BlockSpec((tile_r, 3), lambda i: (i, 0)),           # RevIN params per row
                pl.BlockSpec((T, d_pad), lambda i: (0, 0),
                             pipeline_mode=pl.Buffered(1)),            # grid-invariant weight
                pl.BlockSpec((1, d_pad), lambda i: (0, 0),
                             pipeline_mode=pl.Buffered(1)),            # grid-invariant bias
            ],
            out_specs=pl.BlockSpec((tile_r, d_pad), lambda i: (i, 0)),
        ),
        compiler_params=pltpu.CompilerParams(
            dimension_semantics=("parallel",),
            vmem_limit_bytes=32 * 1024 * 1024,   # tile budget (~20 MiB streams) fits v7x too
        ),
        cost_estimate=cost,
    )(xr, rin_rows, w_eff, b_eff)

    if d_pad != d_output:
        out = out[:, :d_output]                  # drop lane-padding columns (cheap, [R, Dp])
    return out.reshape(B, C, d_output)


# --------------------------------------------------------------------------------------
# Pure-JAX reference (mirrors the PyTorch forward pass) + synthetic params
# --------------------------------------------------------------------------------------
def dlinear_reference(x, params, kernel_size=25):
    B, C, T = x.shape
    aw = params["rin_weight"].reshape(1, C, 1)
    ab = params["rin_bias"].reshape(1, C, 1)
    mean = jnp.mean(x, axis=2, keepdims=True)
    stdev = jnp.sqrt(jnp.var(x, axis=2, keepdims=True) + EPS)
    xn = (x - mean) / stdev * aw + ab
    # moving average with replicate padding along time
    pad = (kernel_size - 1) // 2
    xpad = jnp.concatenate(
        [jnp.repeat(xn[:, :, :1], pad, axis=2), xn, jnp.repeat(xn[:, :, -1:], pad, axis=2)],
        axis=2)
    trend = jnp.stack([xpad[:, :, i:i + T] for i in range(kernel_size)], axis=0).mean(0)
    season = xn - trend
    y = (season @ params["w_season"] + params["b_season"]
         + trend @ params["w_trend"] + params["b_trend"])
    y = (y - ab) / (aw + EPS * EPS) * stdev + mean
    return y


def init_params(key, d_input, d_output, n_input):
    """Deterministic synthetic parameter init (shapes match the torch module)."""
    k1, k2, k3, k4, k5, k6 = jax.random.split(key, 6)
    bound = 1.0 / np.sqrt(d_input)
    return {
        # RIN affine params (torch inits to ones/zeros; perturbed here to be non-trivial)
        "rin_weight": 1.0 + 0.1 * jax.random.normal(k1, (n_input,), jnp.float32),
        "rin_bias": 0.1 * jax.random.normal(k2, (n_input,), jnp.float32),
        # nn.Linear(d_input, d_output) weights stored transposed: [d_input, d_output]
        "w_season": jax.random.uniform(k3, (d_input, d_output), jnp.float32, -bound, bound),
        "b_season": jax.random.uniform(k4, (d_output,), jnp.float32, -bound, bound),
        "w_trend": jax.random.uniform(k5, (d_input, d_output), jnp.float32, -bound, bound),
        "b_trend": jax.random.uniform(k6, (d_output,), jnp.float32, -bound, bound),
    }


if __name__ == "__main__":
    B, C, T, D = 2, 4, 32, 16          # batch, n_input (channels), d_input (seq), d_output
    kernel_size = 25

    key = jax.random.PRNGKey(0)
    kx, kp = jax.random.split(key)
    x = jax.random.normal(kx, (B, C, T), jnp.float32)
    params = init_params(kp, d_input=T, d_output=D, n_input=C)

    # Prepare once (weight fusion, RevIN packing) ...
    prepared, d_out = prepare_dlinear(params, kernel_size=kernel_size)
    # ... then run the kernel.
    out = dlinear_forward(x, prepared["w_eff"], prepared["b_eff"], prepared["rin"],
                          d_output=d_out)
    out = jax.block_until_ready(out)

    ref = dlinear_reference(x, params, kernel_size=kernel_size)
    np.testing.assert_allclose(np.asarray(out), np.asarray(ref), rtol=1e-3, atol=1e-3)

    print("KERNEL_OK")
</pallas_src>

<mosaic_0001>
module attributes {stable_mosaic.version = 11 : i64} {
  func.func @_dlinear_kernel(%arg0: i32, %arg1: memref<8x32xf32, #tpu.memory_space<vmem>>, %arg2: memref<8x3xf32, #tpu.memory_space<vmem>>, %arg3: memref<32x16xf32, #tpu.memory_space<vmem>>, %arg4: memref<1x16xf32, #tpu.memory_space<vmem>>, %arg5: memref<8x16xf32, #tpu.memory_space<vmem>>) attributes {dimension_semantics = [#tpu.dimension_semantics<parallel>], iteration_bounds = array<i64: 1>, scalar_prefetch = 0 : i64, scratch_operands = 0 : i64, tpu.core_type = #tpu.core_type<tc>, window_params = [{transform_indices = @transform_0, window_bounds = array<i64: 8, 32>}, {transform_indices = @transform_1, window_bounds = array<i64: 8, 3>}, {pipeline_mode = #tpu.pipeline_mode<synchronous>, transform_indices = @transform_2, window_bounds = array<i64: 32, 16>}, {pipeline_mode = #tpu.pipeline_mode<synchronous>, transform_indices = @transform_3, window_bounds = array<i64: 1, 16>}, {transform_indices = @transform_4, window_bounds = array<i64: 8, 16>}]} {
    %c0 = arith.constant 0 : index
    %c0_0 = arith.constant 0 : index
    %0 = vector.load %arg1[%c0, %c0_0] : memref<8x32xf32, #tpu.memory_space<vmem>>, vector<8x32xf32>
    %c0_1 = arith.constant 0 : index
    %c0_2 = arith.constant 0 : index
    %1 = vector.load %arg2[%c0_1, %c0_2] : memref<8x3xf32, #tpu.memory_space<vmem>>, vector<8x1xf32>
    %c0_3 = arith.constant 0 : index
    %c1 = arith.constant 1 : index
    %2 = vector.load %arg2[%c0_3, %c1] : memref<8x3xf32, #tpu.memory_space<vmem>>, vector<8x1xf32>
    %c0_4 = arith.constant 0 : index
    %c2 = arith.constant 2 : index
    %3 = vector.load %arg2[%c0_4, %c2] : memref<8x3xf32, #tpu.memory_space<vmem>>, vector<8x1xf32>
    %cst = arith.constant dense<0.000000e+00> : vector<8xf32>
    %4 = vector.multi_reduction <add>, %0, %cst [1] : vector<8x32xf32> to vector<8xf32>
    %5 = vector.shape_cast %4 : vector<8xf32> to vector<8x1xf32>
    %cst_5 = arith.constant 3.125000e-02 : f32
    %6 = vector.broadcast %cst_5 : f32 to vector<8x1xf32>
    %7 = arith.mulf %5, %6 : vector<8x1xf32>
    %8 = vector.broadcast %7 : vector<8x1xf32> to vector<8x32xf32>
    %9 = arith.subf %0, %8 : vector<8x32xf32>
    %10 = arith.mulf %9, %9 : vector<8x32xf32>
    %cst_6 = arith.constant dense<0.000000e+00> : vector<8xf32>
    %11 = vector.multi_reduction <add>, %10, %cst_6 [1] : vector<8x32xf32> to vector<8xf32>
    %12 = vector.shape_cast %11 : vector<8xf32> to vector<8x1xf32>
    %cst_7 = arith.constant 3.125000e-02 : f32
    %13 = vector.broadcast %cst_7 : f32 to vector<8x1xf32>
    %14 = arith.mulf %12, %13 : vector<8x1xf32>
    %cst_8 = arith.constant 9.99999974E-6 : f32
    %15 = vector.broadcast %cst_8 : f32 to vector<8x1xf32>
    %16 = arith.addf %14, %15 : vector<8x1xf32>
    %17 = math.rsqrt %16 : vector<8x1xf32>
    %cst_9 = arith.constant 9.99999974E-6 : f32
    %18 = vector.broadcast %cst_9 : f32 to vector<8x1xf32>
    %19 = arith.addf %14, %18 : vector<8x1xf32>
    %20 = arith.mulf %19, %17 : vector<8x1xf32>
    %21 = arith.mulf %17, %1 : vector<8x1xf32>
    %22 = vector.broadcast %21 : vector<8x1xf32> to vector<8x32xf32>
    %23 = arith.mulf %9, %22 : vector<8x32xf32>
    %24 = vector.broadcast %2 : vector<8x1xf32> to vector<8x32xf32>
    %25 = arith.addf %23, %24 : vector<8x32xf32>
    %c0_10 = arith.constant 0 : index
    %c0_11 = arith.constant 0 : index
    %26 = vector.load %arg3[%c0_10, %c0_11] : memref<32x16xf32, #tpu.memory_space<vmem>>, vector<32x16xf32>
    %cst_12 = arith.constant dense<0.000000e+00> : vector<8x16xf32>
    %27 = tpu.matmul %25, %26, %cst_12 {dimension_numbers = #tpu.dot_dimension_numbers<[1], [0], [0], [1], [0, 0, 1, 1], [], []>} : vector<8x32xf32>, vector<32x16xf32>, vector<8x16xf32> -> vector<8x16xf32>
    %c0_13 = arith.constant 0 : index
    %c0_14 = arith.constant 0 : index
    %28 = vector.load %arg4[%c0_13, %c0_14] : memref<1x16xf32, #tpu.memory_space<vmem>>, vector<1x16xf32>
    %29 = vector.broadcast %28 : vector<1x16xf32> to vector<8x16xf32>
    %30 = arith.addf %27, %29 : vector<8x16xf32>
    %31 = vector.broadcast %2 : vector<8x1xf32> to vector<8x16xf32>
    %32 = arith.subf %30, %31 : vector<8x16xf32>
    %33 = arith.mulf %3, %20 : vector<8x1xf32>
    %34 = vector.broadcast %33 : vector<8x1xf32> to vector<8x16xf32>
    %35 = arith.mulf %32, %34 : vector<8x16xf32>
    %36 = vector.broadcast %7 : vector<8x1xf32> to vector<8x16xf32>
    %37 = arith.addf %35, %36 : vector<8x16xf32>
    %c0_15 = arith.constant 0 : index
    %c0_16 = arith.constant 0 : index
    %38 = vector.load %arg5[%c0_15, %c0_16] : memref<8x16xf32, #tpu.memory_space<vmem>>, vector<8x16xf32>
    tpu.vector_store %arg5[%c0_15, %c0_16], %37 {strides = array<i32>} : memref<8x16xf32, #tpu.memory_space<vmem>>, vector<8x16xf32>,
    return
  }
  func.func @transform_0(%arg0: i32) -> (i32, i32) {
    %c0_i32 = arith.constant 0 : i32
    %c0_i32_0 = arith.constant 0 : i32
    return %arg0, %c0_i32 : i32, i32
  }
  func.func @transform_1(%arg0: i32) -> (i32, i32) {
    %c0_i32 = arith.constant 0 : i32
    %c0_i32_0 = arith.constant 0 : i32
    return %arg0, %c0_i32 : i32, i32
  }
  func.func @transform_2(%arg0: i32) -> (i32, i32) {
    %c0_i32 = arith.constant 0 : i32
    %c0_i32_0 = arith.constant 0 : i32
    %c0_i32_1 = arith.constant 0 : i32
    return %c0_i32, %c0_i32_0 : i32, i32
  }
  func.func @transform_3(%arg0: i32) -> (i32, i32) {
    %c0_i32 = arith.constant 0 : i32
    %c0_i32_0 = arith.constant 0 : i32
    %c0_i32_1 = arith.constant 0 : i32
    return %c0_i32, %c0_i32_0 : i32, i32
  }
  func.func @transform_4(%arg0: i32) -> (i32, i32) {
    %c0_i32 = arith.constant 0 : i32
    %c0_i32_0 = arith.constant 0 : i32
    return %arg0, %c0_i32 : i32, i32
  }
}

</mosaic_0001>

<llo_original>
// kernel: dlinear_forward.1
$region0: #{dlinear_forward.1}
  #allocation0 [shape = 'u32[]', space=smem, size = 0x4, offset = 0x4, fixed_abs, tag = 'smem constant byte address 0x4 - core index']
  #allocation1 [shape = 'u32[72,128]{1,0:T(1,128)}', space=vmem, size = 0x9000, scoped, tag = 'internal scratch']
  %s0 = inlined_call_operand.vmem [shape: f32[8,32], index: 0, kind: input, shape index: {}]
  %s1 = inlined_call_operand.vmem [shape: f32[8,3], index: 1, kind: input, shape index: {}]
  %s2 = inlined_call_operand.vmem [shape: f32[32,16], index: 2, kind: input, shape index: {}]
  %s3 = inlined_call_operand.vmem [shape: f32[1,16], index: 3, kind: input, shape index: {}]
  %s4 = inlined_call_operand.hbm [shape: f32[8,16], index: 4, kind: output, shape index: {}]
  %s5 = sld [smem:[#allocation0]]
  $region26: #{dlinear_forward.1} parent=0
    _
  %s7 = ssub.s32 1, %s5
  %s8 = scalar_select 0, %s7, %s5
  $region1: #{dlinear_forward.1} parent=0
    #allocation2 [shape = 'u8[4096]{0}', space=vmem, size = 0x1000, scoped, tag = 'output window, operand 0, single buffered']
    #allocation3 [shape = 's32[1]{0}', space=sflag, size = 0x4, scoped, tag = 'scoped memory for dlinear_forward.1']
    %9 = vsyncpa [#allocation3], 0
    // Predicated region
    $region2: #{dlinear_forward.1} parent=1 // pred_check
      _
    $region3: #{dlinear_forward.1} parent=1 // pred_check_branch
      %11 = sbr.rel (0) target = $region5
    $region4: #{dlinear_forward.1} parent=1 // pred_region
      _
    $region5: #{dlinear_forward.1} parent=1 // pred_fallthru
      _
    // Predicated region
    $region6: #{dlinear_forward.1} parent=1 // pred_check
      _
    $region7: #{dlinear_forward.1} parent=1 // pred_check_branch
      %13 = sbr.rel (0) target = $region9
    $region8: #{dlinear_forward.1} parent=1 // pred_region
      _
    $region9: #{dlinear_forward.1} parent=1 // pred_fallthru
      _
    // Predicated region
    $region10: #{dlinear_forward.1} parent=1 // pred_check
      _
    $region11: #{dlinear_forward.1} parent=1 // pred_check_branch
      %15 = sbr.rel (0) target = $region13
    $region12: #{dlinear_forward.1} parent=1 // pred_region
      _
    $region13: #{dlinear_forward.1} parent=1 // pred_fallthru
      _
    // Predicated region
    $region14: #{dlinear_forward.1} parent=1 // pred_check
      _
    $region15: #{dlinear_forward.1} parent=1 // pred_check_branch
      %17 = sbr.rel (0) target = $region17
    $region16: #{dlinear_forward.1} parent=1 // pred_region
      _
    $region17: #{dlinear_forward.1} parent=1 // pred_fallthru
      _
    %v18 = vld [vmem:[%s0] sm:$0xff]
    %v19 = vld [vmem:[%s1] sm:$0xff]
    %vm20 = vcmask 261120
    %v21 = vsel %vm20, %v18, 0.0
    %22 = vadd.xlane.f32.xlu0 %v21
    %v23 = vpop.xlane.xlu0 %22
    %v24 = vmul.f32 %v23, 0.03125
    %v25 = vsub.f32 %v18, %v24
    %v26 = vmul.f32 %v25, %v25
    %v27 = vsel %vm20, %v26, 0.0
    %28 = vadd.xlane.f32.xlu0 %v27
    %v29 = vpop.xlane.xlu0 %28
    %v30 = vmul.f32 %v29, 0.03125
    %v31 = vadd.f32 %v30, 1e-05
    %v32 = vrsqrt.pop %v31
    %v33 = vmul.f32 %v32, %v31
    %v34 = vmul.f32 %v33, %v32
    %v35 = vmul.f32 0.5, %v34
    %v36 = vsub.f32 1.5, %v35
    %v37 = vmul.f32 %v32, %v36
    %vm38 = vweird.f32 %v31
    %vm39 = vweird.f32 %v32
    %vm40 = vmor %vm38, %vm39
    %v41 = vsel %vm40, %v32, %v37
    %v42 = vmul.f32 %v31, %v41
    %v43 = vmul.f32 %v41, %v19
    %45 = vset.pattern.permute.xlu0 0
    %46 = vperm.xlu0 %45, %v43
    %v47 = vpop.permute.xlu0 %46
    %v49 = vmul.f32 %v25, %v47
    %51 = vset.pattern.permute.xlu0 1
    %52 = vperm.xlu0 %51, %v19
    %v53 = vpop.permute.xlu0 %52
    %v55 = vadd.f32 %v49, %v53
    %v56 = vld [vmem:[%s2] sm:$0xff]
    %v57 = vld [vmem:[%s2 + $0x8] sm:$0xff]
    %v58 = vld [vmem:[%s2 + $0x10] sm:$0xff]
    %v59 = vld [vmem:[%s2 + $0x18] sm:$0xff]
    %v60 = vld [vmem:[%s3] sm:$0x1]
    %v62 = vperm.slane %v60, 0
    %v65 = vsel %vm20, %v55, 0
    %67 = vmatpush.msra.mxu0 0.0
    %68 = vmatpush.msra.mxu0 0.0
    %69 = vmatpush.msra.mxu0 0.0
    %70 = vmatpush.msra.mxu0 0.0
    %71 = vmatpush.msra.mxu0 0.0
    %72 = vmatpush.msra.mxu0 0.0
    %73 = vmatpush.msra.mxu0 0.0
    %74 = vmatpush.msra.mxu0 0.0
    %75 = vmatpush.msra.mxu0 0.0
    %76 = vmatpush.msra.mxu0 0.0
    %77 = vmatpush.msra.mxu0 0.0
    %78 = vmatpush.msra.mxu0 0.0
    %79 = vmatpush.msra.mxu0 %v59
    %80 = vmatpush.msra.mxu0 %v58
    %81 = vmatpush.msra.mxu0 %v57
    %82 = vmatpush.msra.mxu0 %v56
    %83 = vmatmul.f32.gmra.mxu0 %v65
    %v84 = vpop.f32.mrf.mxu0
    %v85 = vadd.f32 %v62, %v84
    %86 = vdwg.mxu0
    %v87 = vsub.f32 %v85, %v53
    %v88 = vmul.f32 %v19, %v42
    %90 = vset.pattern.permute.xlu0 2
    %91 = vperm.xlu0 %90, %v88
    %v92 = vpop.permute.xlu0 %91
    %v94 = vmul.f32 %v87, %v92
    %v95 = vadd.f32 %v94, %v24
    %vm96 = vcmask 130048
    %97 = vst.msk [vmem:[#allocation2] sm:$0xff] %vm96, %v95
    // Predicated region
    $region18: #{dlinear_forward.1} parent=1 // pred_check
      _
    $region19: #{dlinear_forward.1} parent=1 // pred_check_branch
      %99 = sbr.rel (0) target = $region21
    $region20: #{dlinear_forward.1} parent=1 // pred_region
      %101 = vsyncadd [#allocation3], 0
      %s103 = sshll.u32 [#allocation2], 4
      %s104 = int_to_ptr.vmem [resolvable:$true] %s103
      %s105 = sshll.u32 %s4, 4
      %s106 = int_to_ptr.hbm [resolvable:$true] %s105
      %108 = dma.vmem_to_hbm [thread:$0]  %s104, 128, %s106, [#allocation3]
    $region21: #{dlinear_forward.1} parent=1 // pred_fallthru
      _
    // Predicated region
    $region22: #{dlinear_forward.1} parent=1 // pred_check
      _
    $region23: #{dlinear_forward.1} parent=1 // pred_check_branch
      %110 = sbr.rel (0) target = $region25
    $region24: #{dlinear_forward.1} parent=1 // pred_region
      %112 = dma.done [#allocation3], 128
    $region25: #{dlinear_forward.1} parent=1 // pred_fallthru
      _
    %113 = vsyncpa [#allocation3], 1

</llo_original>
